<compile_context>
chip_gen: v6e
topology: v6e:2x2x1
jax: 0.10.0
libtpu: 0.0.40
codegen_flags: <defaults>
</compile_context>

<pallas_src>
import functools

import jax
import jax.numpy as jnp
from jax.experimental import pallas as pl
from jax.experimental.pallas import tpu as pltpu

D_IN = 166
D_H1 = 166
D_H2 = 83
D_OUT = 1


def _dnn_kernel(x_ref,
                w1_ref, b1_ref,
                w2_ref, b2_ref,
                w3_ref, b3_ref,
                w4_ref, b4_ref,
                o_ref):
    # x_ref: (D_IN, block_b) bf16  — batch on the lane axis.
    # w*_ref: PyTorch layout (out, in), bf16 (w4 is f32, shaped (D_H2, 1)).
    # b*_ref: (out, 1) f32.
    x = x_ref[...]

    # Linear(166,166) -> (Dropout = identity in eval) -> ReLU
    h = jnp.dot(w1_ref[...], x, preferred_element_type=jnp.float32)
    h = jnp.maximum(h + b1_ref[...], 0.0)

    # Linear(166,166) -> ReLU
    h = jnp.dot(w2_ref[...], h.astype(jnp.bfloat16),
                preferred_element_type=jnp.float32)
    h = jnp.maximum(h + b2_ref[...], 0.0)

    # Linear(166,83) -> ReLU
    h = jnp.dot(w3_ref[...], h.astype(jnp.bfloat16),
                preferred_element_type=jnp.float32)
    h = jnp.maximum(h + b3_ref[...], 0.0)

    # Linear(83,1) -> ReLU : VPU multiply + sublane reduce (avoids an M=1 MXU
    # matmul that would waste the whole systolic array).
    out = jnp.sum(w4_ref[...] * h, axis=0, keepdims=True) + b4_ref[...]
    out = jnp.maximum(out, 0.0)

    o_ref[...] = out.astype(o_ref.dtype)  # (1, block_b) — lane-dense store


@functools.partial(jax.jit, static_argnames=("block_b",))
def dnn_forward(x, params, *, block_b=256):
    """x: [B, 166] float32 -> [B, 1] float32 (eval-mode forward)."""
    assert block_b % 128 == 0, "block_b must be a multiple of 128 (lane axis)"
    (w1, b1), (w2, b2), (w3, b3), (w4, b4) = params

    B = x.shape[0]
    B_pad = ((B + block_b - 1) // block_b) * block_b

    # bf16 matmul inputs, f32 accumulation downstream.
    x_bf = x.astype(jnp.bfloat16)
    if B_pad != B:
        x_bf = jnp.pad(x_bf, ((0, B_pad - B), (0, 0)))
    xt = x_bf.T                                   # (D_IN, B_pad), batch on lanes

    w1b, w2b, w3b = (w.astype(jnp.bfloat16) for w in (w1, w2, w3))
    w4c = w4.T.astype(jnp.float32)                # (D_H2, 1), used on the VPU
    b1r, b2r, b3r, b4r = (b.reshape(-1, 1).astype(jnp.float32)
                          for b in (b1, b2, b3, b4))

    grid = (B_pad // block_b,)
    full = lambda shape: pl.BlockSpec(shape, lambda i: (0, 0))

    out_t = pl.pallas_call(
        _dnn_kernel,
        out_shape=jax.ShapeDtypeStruct((D_OUT, B_pad), jnp.float32),
        grid_spec=pltpu.PrefetchScalarGridSpec(
            num_scalar_prefetch=0,
            grid=grid,
            in_specs=[
                pl.BlockSpec((D_IN, block_b), lambda i: (0, i)),  # x tile
                full((D_H1, D_IN)), full((D_H1, 1)),              # layer 1
                full((D_H1, D_H1)), full((D_H1, 1)),              # layer 2
                full((D_H2, D_H1)), full((D_H2, 1)),              # layer 3
                full((D_H2, D_OUT)), full((D_OUT, 1)),            # layer 4
            ],
            out_specs=pl.BlockSpec((D_OUT, block_b), lambda i: (0, i)),
        ),
        compiler_params=pltpu.CompilerParams(
            dimension_semantics=("parallel",)),
    )(xt, w1b, b1r, w2b, b2r, w3b, b3r, w4c, b4r)

    return out_t.T[:B]                            # (B, 1)


def init_params(key):
    """Deterministic init mimicking PyTorch nn.Linear default (U(-1/sqrt(in), 1/sqrt(in)))."""
    dims = [(D_IN, D_H1), (D_H1, D_H1), (D_H1, D_H2), (D_H2, D_OUT)]
    params = []
    for (fan_in, fan_out) in dims:
        key, kw, kb = jax.random.split(key, 3)
        bound = 1.0 / jnp.sqrt(fan_in)
        # PyTorch weight layout: (out_features, in_features)
        w = jax.random.uniform(kw, (fan_out, fan_in), jnp.float32, -bound, bound)
        b = jax.random.uniform(kb, (fan_out,), jnp.float32, -bound, bound)
        params.append((w, b))
    return params


def dnn_reference(x, params):
    """Pure-JAX reference matching the kernel's dtype semantics
    (bf16 matmul inputs, f32 accumulation / bias / ReLU)."""
    (w1, b1), (w2, b2), (w3, b3), (w4, b4) = params
    h = x
    for (w, b) in ((w1, b1), (w2, b2), (w3, b3)):
        h = jnp.dot(h.astype(jnp.bfloat16), w.T.astype(jnp.bfloat16),
                    preferred_element_type=jnp.float32) + b
        h = jnp.maximum(h, 0.0)
    h = jnp.maximum(h @ w4.T + b4, 0.0)
    return h


def dnn_reference_f32(x, params):
    """Pure-f32 reference of the eval-mode forward pass (sanity bound)."""
    h = x
    for (w, b) in params:
        h = jnp.maximum(h @ w.T + b, 0.0)
    return h


if __name__ == "__main__":
    key = jax.random.PRNGKey(0)
    kp, kx = jax.random.split(key)

    params = init_params(kp)
    B = 8
    x = jax.random.normal(kx, (B, D_IN), jnp.float32)

    out = dnn_forward(x, params)
    out = jax.block_until_ready(out)

    assert out.shape == (B, 1)

    ref_bf = dnn_reference(x, params)
    assert jnp.allclose(out, ref_bf, atol=2e-3, rtol=2e-3), "mismatch vs bf16 reference"

    ref_f32 = dnn_reference_f32(x, params)
    assert jnp.allclose(out, ref_f32, atol=5e-2, rtol=5e-2), "mismatch vs f32 reference"

    print("KERNEL_OK")
</pallas_src>

<mosaic_0001>
module attributes {stable_mosaic.version = 11 : i64} {
  func.func @_dnn_kernel(%arg0: i32, %arg1: memref<166x256xbf16, #tpu.memory_space<vmem>>, %arg2: memref<166x166xbf16, #tpu.memory_space<vmem>>, %arg3: memref<166x1xf32, #tpu.memory_space<vmem>>, %arg4: memref<166x166xbf16, #tpu.memory_space<vmem>>, %arg5: memref<166x1xf32, #tpu.memory_space<vmem>>, %arg6: memref<83x166xbf16, #tpu.memory_space<vmem>>, %arg7: memref<83x1xf32, #tpu.memory_space<vmem>>, %arg8: memref<83x1xf32, #tpu.memory_space<vmem>>, %arg9: memref<1x1xf32, #tpu.memory_space<vmem>>, %arg10: memref<1x256xf32, #tpu.memory_space<vmem>>) attributes {dimension_semantics = [#tpu.dimension_semantics<parallel>], iteration_bounds = array<i64: 1>, scalar_prefetch = 0 : i64, scratch_operands = 0 : i64, tpu.core_type = #tpu.core_type<tc>, window_params = [{transform_indices = @transform_0, window_bounds = array<i64: 166, 256>}, {pipeline_mode = #tpu.pipeline_mode<synchronous>, transform_indices = @transform_1, window_bounds = array<i64: 166, 166>}, {pipeline_mode = #tpu.pipeline_mode<synchronous>, transform_indices = @transform_2, window_bounds = array<i64: 166, 1>}, {pipeline_mode = #tpu.pipeline_mode<synchronous>, transform_indices = @transform_3, window_bounds = array<i64: 166, 166>}, {pipeline_mode = #tpu.pipeline_mode<synchronous>, transform_indices = @transform_4, window_bounds = array<i64: 166, 1>}, {pipeline_mode = #tpu.pipeline_mode<synchronous>, transform_indices = @transform_5, window_bounds = array<i64: 83, 166>}, {pipeline_mode = #tpu.pipeline_mode<synchronous>, transform_indices = @transform_6, window_bounds = array<i64: 83, 1>}, {pipeline_mode = #tpu.pipeline_mode<synchronous>, transform_indices = @transform_7, window_bounds = array<i64: 83, 1>}, {pipeline_mode = #tpu.pipeline_mode<synchronous>, transform_indices = @transform_8, window_bounds = array<i64: 1, 1>}, {transform_indices = @transform_9, window_bounds = array<i64: 1, 256>}]} {
    %c0 = arith.constant 0 : index
    %c0_0 = arith.constant 0 : index
    %0 = vector.load %arg1[%c0, %c0_0] : memref<166x256xbf16, #tpu.memory_space<vmem>>, vector<166x256xbf16>
    %c0_1 = arith.constant 0 : index
    %c0_2 = arith.constant 0 : index
    %1 = vector.load %arg2[%c0_1, %c0_2] : memref<166x166xbf16, #tpu.memory_space<vmem>>, vector<166x166xbf16>
    %cst = arith.constant dense<0.000000e+00> : vector<166x256xf32>
    %2 = tpu.matmul %1, %0, %cst {dimension_numbers = #tpu.dot_dimension_numbers<[1], [0], [0], [1], [0, 0, 1, 1], [], []>} : vector<166x166xbf16>, vector<166x256xbf16>, vector<166x256xf32> -> vector<166x256xf32>
    %c0_3 = arith.constant 0 : index
    %c0_4 = arith.constant 0 : index
    %3 = vector.load %arg3[%c0_3, %c0_4] : memref<166x1xf32, #tpu.memory_space<vmem>>, vector<166x1xf32>
    %4 = vector.broadcast %3 : vector<166x1xf32> to vector<166x256xf32>
    %5 = arith.addf %2, %4 : vector<166x256xf32>
    %cst_5 = arith.constant 0.000000e+00 : f32
    %6 = vector.broadcast %cst_5 : f32 to vector<166x256xf32>
    %7 = arith.maximumf %5, %6 : vector<166x256xf32>
    %c0_6 = arith.constant 0 : index
    %c0_7 = arith.constant 0 : index
    %8 = vector.load %arg4[%c0_6, %c0_7] : memref<166x166xbf16, #tpu.memory_space<vmem>>, vector<166x166xbf16>
    %9 = arith.truncf %7 : vector<166x256xf32> to vector<166x256xbf16>
    %cst_8 = arith.constant dense<0.000000e+00> : vector<166x256xf32>
    %10 = tpu.matmul %8, %9, %cst_8 {dimension_numbers = #tpu.dot_dimension_numbers<[1], [0], [0], [1], [0, 0, 1, 1], [], []>} : vector<166x166xbf16>, vector<166x256xbf16>, vector<166x256xf32> -> vector<166x256xf32>
    %c0_9 = arith.constant 0 : index
    %c0_10 = arith.constant 0 : index
    %11 = vector.load %arg5[%c0_9, %c0_10] : memref<166x1xf32, #tpu.memory_space<vmem>>, vector<166x1xf32>
    %12 = vector.broadcast %11 : vector<166x1xf32> to vector<166x256xf32>
    %13 = arith.addf %10, %12 : vector<166x256xf32>
    %cst_11 = arith.constant 0.000000e+00 : f32
    %14 = vector.broadcast %cst_11 : f32 to vector<166x256xf32>
    %15 = arith.maximumf %13, %14 : vector<166x256xf32>
    %c0_12 = arith.constant 0 : index
    %c0_13 = arith.constant 0 : index
    %16 = vector.load %arg6[%c0_12, %c0_13] : memref<83x166xbf16, #tpu.memory_space<vmem>>, vector<83x166xbf16>
    %17 = arith.truncf %15 : vector<166x256xf32> to vector<166x256xbf16>
    %cst_14 = arith.constant dense<0.000000e+00> : vector<83x256xf32>
    %18 = tpu.matmul %16, %17, %cst_14 {dimension_numbers = #tpu.dot_dimension_numbers<[1], [0], [0], [1], [0, 0, 1, 1], [], []>} : vector<83x166xbf16>, vector<166x256xbf16>, vector<83x256xf32> -> vector<83x256xf32>
    %c0_15 = arith.constant 0 : index
    %c0_16 = arith.constant 0 : index
    %19 = vector.load %arg7[%c0_15, %c0_16] : memref<83x1xf32, #tpu.memory_space<vmem>>, vector<83x1xf32>
    %20 = vector.broadcast %19 : vector<83x1xf32> to vector<83x256xf32>
    %21 = arith.addf %18, %20 : vector<83x256xf32>
    %cst_17 = arith.constant 0.000000e+00 : f32
    %22 = vector.broadcast %cst_17 : f32 to vector<83x256xf32>
    %23 = arith.maximumf %21, %22 : vector<83x256xf32>
    %c0_18 = arith.constant 0 : index
    %c0_19 = arith.constant 0 : index
    %24 = vector.load %arg8[%c0_18, %c0_19] : memref<83x1xf32, #tpu.memory_space<vmem>>, vector<83x1xf32>
    %25 = vector.broadcast %24 : vector<83x1xf32> to vector<83x256xf32>
    %26 = arith.mulf %25, %23 : vector<83x256xf32>
    %cst_20 = arith.constant dense<0.000000e+00> : vector<256xf32>
    %27 = vector.multi_reduction <add>, %26, %cst_20 [0] : vector<83x256xf32> to vector<256xf32>
    %28 = vector.shape_cast %27 : vector<256xf32> to vector<1x256xf32>
    %c0_21 = arith.constant 0 : index
    %c0_22 = arith.constant 0 : index
    %29 = vector.load %arg9[%c0_21, %c0_22] : memref<1x1xf32, #tpu.memory_space<vmem>>, vector<1x1xf32>
    %30 = vector.broadcast %29 : vector<1x1xf32> to vector<1x256xf32>
    %31 = arith.addf %28, %30 : vector<1x256xf32>
    %cst_23 = arith.constant 0.000000e+00 : f32
    %32 = vector.broadcast %cst_23 : f32 to vector<1x256xf32>
    %33 = arith.maximumf %31, %32 : vector<1x256xf32>
    %c0_24 = arith.constant 0 : index
    %c0_25 = arith.constant 0 : index
    %34 = vector.load %arg10[%c0_24, %c0_25] : memref<1x256xf32, #tpu.memory_space<vmem>>, vector<1x256xf32>
    tpu.vector_store %arg10[%c0_24, %c0_25], %33 {strides = array<i32>} : memref<1x256xf32, #tpu.memory_space<vmem>>, vector<1x256xf32>,
    return
  }
  func.func @transform_0(%arg0: i32) -> (i32, i32) {
    %c0_i32 = arith.constant 0 : i32
    %c0_i32_0 = arith.constant 0 : i32
    return %c0_i32, %arg0 : i32, i32
  }
  func.func @transform_1(%arg0: i32) -> (i32, i32) {
    %c0_i32 = arith.constant 0 : i32
    %c0_i32_0 = arith.constant 0 : i32
    %c0_i32_1 = arith.constant 0 : i32
    return %c0_i32, %c0_i32_0 : i32, i32
  }
  func.func @transform_2(%arg0: i32) -> (i32, i32) {
    %c0_i32 = arith.constant 0 : i32
    %c0_i32_0 = arith.constant 0 : i32
    %c0_i32_1 = arith.constant 0 : i32
    return %c0_i32, %c0_i32_0 : i32, i32
  }
  func.func @transform_3(%arg0: i32) -> (i32, i32) {
    %c0_i32 = arith.constant 0 : i32
    %c0_i32_0 = arith.constant 0 : i32
    %c0_i32_1 = arith.constant 0 : i32
    return %c0_i32, %c0_i32_0 : i32, i32
  }
  func.func @transform_4(%arg0: i32) -> (i32, i32) {
    %c0_i32 = arith.constant 0 : i32
    %c0_i32_0 = arith.constant 0 : i32
    %c0_i32_1 = arith.constant 0 : i32
    return %c0_i32, %c0_i32_0 : i32, i32
  }
  func.func @transform_5(%arg0: i32) -> (i32, i32) {
    %c0_i32 = arith.constant 0 : i32
    %c0_i32_0 = arith.constant 0 : i32
    %c0_i32_1 = arith.constant 0 : i32
    return %c0_i32, %c0_i32_0 : i32, i32
  }
  func.func @transform_6(%arg0: i32) -> (i32, i32) {
    %c0_i32 = arith.constant 0 : i32
    %c0_i32_0 = arith.constant 0 : i32
    %c0_i32_1 = arith.constant 0 : i32
    return %c0_i32, %c0_i32_0 : i32, i32
  }
  func.func @transform_7(%arg0: i32) -> (i32, i32) {
    %c0_i32 = arith.constant 0 : i32
    %c0_i32_0 = arith.constant 0 : i32
    %c0_i32_1 = arith.constant 0 : i32
    return %c0_i32, %c0_i32_0 : i32, i32
  }
  func.func @transform_8(%arg0: i32) -> (i32, i32) {
    %c0_i32 = arith.constant 0 : i32
    %c0_i32_0 = arith.constant 0 : i32
    %c0_i32_1 = arith.constant 0 : i32
    return %c0_i32, %c0_i32_0 : i32, i32
  }
  func.func @transform_9(%arg0: i32) -> (i32, i32) {
    %c0_i32 = arith.constant 0 : i32
    %c0_i32_0 = arith.constant 0 : i32
    return %c0_i32, %arg0 : i32, i32
  }
}

</mosaic_0001>

<llo_original>
// kernel: dnn_forward.1
$region0: #{dnn_forward.1}
  #allocation0 [shape = 'u32[]', space=smem, size = 0x4, offset = 0x4, fixed_abs, tag = 'smem constant byte address 0x4 - core index']
  #allocation1 [shape = 'u32[144,128]{1,0:T(1,128)}', space=vmem, size = 0x12000, scoped, tag = 'internal scratch']
  #allocation2 [shape = 'f32[1,1]{1,0:T(1,128)S(1)}', space=vmem, size = 0x200, scoped, tag = 'scoped memory for dnn_forward.1']
  %s0 = inlined_call_operand.vmem [shape: bf16[166,256], index: 0, kind: input, shape index: {}]
  %s1 = inlined_call_operand.vmem [shape: bf16[166,166], index: 1, kind: input, shape index: {}]
  %s2 = inlined_call_operand.vmem [shape: f32[166,1], index: 2, kind: input, shape index: {}]
  %s3 = inlined_call_operand.vmem [shape: bf16[166,166], index: 3, kind: input, shape index: {}]
  %s4 = inlined_call_operand.vmem [shape: f32[166,1], index: 4, kind: input, shape index: {}]
  %s5 = inlined_call_operand.vmem [shape: bf16[83,166], index: 5, kind: input, shape index: {}]
  %s6 = inlined_call_operand.vmem [shape: f32[83,1], index: 6, kind: input, shape index: {}]
  %s7 = inlined_call_operand.vmem [shape: f32[83,1], index: 7, kind: input, shape index: {}]
  %s8 = inlined_call_operand.<no memory space> [shape: f32[1,1], index: 8, kind: input, shape index: {}]
  %s9 = inlined_call_operand.vmem [shape: f32[1,256], index: 9, kind: output, shape index: {}]
  %s10 = sld [smem:[#allocation0]]
  $region46: #{dnn_forward.1} parent=0
    _
  %s12 = ssub.s32 1, %s10
  %s13 = scalar_select 0, %s12, %s10
  %v14 = vstv %s8
  %15 = vst [vmem:[#allocation2] sm:$0x1] %v14
  // Predicated region
  $region2: #{dnn_forward.1} parent=0 // pred_check
    _
  $region3: #{dnn_forward.1} parent=0 // pred_check_branch
    %17 = sbr.rel (0) target = $region5
  $region4: #{dnn_forward.1} parent=0 // pred_region
    _
  $region5: #{dnn_forward.1} parent=0 // pred_fallthru
    _
  // Predicated region
  $region6: #{dnn_forward.1} parent=0 // pred_check
    _
  $region7: #{dnn_forward.1} parent=0 // pred_check_branch
    %19 = sbr.rel (0) target = $region9
  $region8: #{dnn_forward.1} parent=0 // pred_region
    _
  $region9: #{dnn_forward.1} parent=0 // pred_fallthru
    _
  // Predicated region
  $region10: #{dnn_forward.1} parent=0 // pred_check
    _
  $region11: #{dnn_forward.1} parent=0 // pred_check_branch
    %21 = sbr.rel (0) target = $region13
  $region12: #{dnn_forward.1} parent=0 // pred_region
    _
  $region13: #{dnn_forward.1} parent=0 // pred_fallthru
    _
  // Predicated region
  $region14: #{dnn_forward.1} parent=0 // pred_check
    _
  $region15: #{dnn_forward.1} parent=0 // pred_check_branch
    %23 = sbr.rel (0) target = $region17
  $region16: #{dnn_forward.1} parent=0 // pred_region
    _
  $region17: #{dnn_forward.1} parent=0 // pred_fallthru
    _
  // Predicated region
  $region18: #{dnn_forward.1} parent=0 // pred_check
    _
  $region19: #{dnn_forward.1} parent=0 // pred_check_branch
    %25 = sbr.rel (0) target = $region21
  $region20: #{dnn_forward.1} parent=0 // pred_region
    _
  $region21: #{dnn_forward.1} parent=0 // pred_fallthru
    _
  // Predicated region
  $region22: #{dnn_forward.1} parent=0 // pred_check
    _
  $region23: #{dnn_forward.1} parent=0 // pred_check_branch
    %27 = sbr.rel (0) target = $region25
  $region24: #{dnn_forward.1} parent=0 // pred_region
    _
  $region25: #{dnn_forward.1} parent=0 // pred_fallthru
    _
  // Predicated region
  $region26: #{dnn_forward.1} parent=0 // pred_check
    _
  $region27: #{dnn_forward.1} parent=0 // pred_check_branch
    %29 = sbr.rel (0) target = $region29
  $region28: #{dnn_forward.1} parent=0 // pred_region
    _
  $region29: #{dnn_forward.1} parent=0 // pred_fallthru
    _
  // Predicated region
  $region30: #{dnn_forward.1} parent=0 // pred_check
    _
  $region31: #{dnn_forward.1} parent=0 // pred_check_branch
    %31 = sbr.rel (0) target = $region33
  $region32: #{dnn_forward.1} parent=0 // pred_region
    _
  $region33: #{dnn_forward.1} parent=0 // pred_fallthru
    _
  // Predicated region
  $region34: #{dnn_forward.1} parent=0 // pred_check
    _
  $region35: #{dnn_forward.1} parent=0 // pred_check_branch
    %33 = sbr.rel (0) target = $region37
  $region36: #{dnn_forward.1} parent=0 // pred_region
    _
  $region37: #{dnn_forward.1} parent=0 // pred_fallthru
    _
  %v35 = vld [vmem:[%s0] sm:$0xff]
  %v36 = vld [vmem:[%s0 + $0x8] sm:$0xff]
  %v37 = vld [vmem:[%s0 + $0x10] sm:$0xff]
  %v38 = vld [vmem:[%s0 + $0x18] sm:$0xff]
  %v39 = vld [vmem:[%s0 + $0x20] sm:$0xff]
  %v40 = vld [vmem:[%s0 + $0x28] sm:$0xff]
  %v41 = vld [vmem:[%s0 + $0x30] sm:$0xff]
  %v42 = vld [vmem:[%s0 + $0x38] sm:$0xff]
  %v43 = vld [vmem:[%s0 + $0x40] sm:$0xff]
  %v44 = vld [vmem:[%s0 + $0x48] sm:$0xff]
  %v45 = vld [vmem:[%s0 + $0x50] sm:$0xff]
  %v46 = vld [vmem:[%s0 + $0x58] sm:$0xff]
  %v47 = vld [vmem:[%s0 + $0x60] sm:$0xff]
  %v48 = vld [vmem:[%s0 + $0x68] sm:$0xff]
  %v49 = vld [vmem:[%s0 + $0x70] sm:$0xff]
  %v50 = vld [vmem:[%s0 + $0x78] sm:$0xff]
  %v51 = vld [vmem:[%s0 + $0x80] sm:$0xff]
  %v52 = vld [vmem:[%s0 + $0x88] sm:$0xff]
  %v53 = vld [vmem:[%s0 + $0x90] sm:$0xff]
  %v54 = vld [vmem:[%s0 + $0x98] sm:$0xff]
  %v55 = vld [vmem:[%s0 + $0xa0] sm:$0x77]
  %v56 = vld [vmem:[%s1] sm:$0xff]
  %v57 = vld [vmem:[%s1 + $0x8] sm:$0xff]
  %v58 = vld [vmem:[%s1 + $0x10] sm:$0xff]
  %v59 = vld [vmem:[%s1 + $0x18] sm:$0xff]
  %v60 = vld [vmem:[%s1 + $0x20] sm:$0xff]
  %v61 = vld [vmem:[%s1 + $0x28] sm:$0xff]
  %v62 = vld [vmem:[%s1 + $0x30] sm:$0xff]
  %v63 = vld [vmem:[%s1 + $0x38] sm:$0xff]
  %v64 = vld [vmem:[%s1 + $0x40] sm:$0xff]
  %v65 = vld [vmem:[%s1 + $0x48] sm:$0xff]
  %v66 = vld [vmem:[%s1 + $0x50] sm:$0xff]
  %v67 = vld [vmem:[%s1 + $0x58] sm:$0xff]
  %v68 = vld [vmem:[%s1 + $0x60] sm:$0xff]
  %v69 = vld [vmem:[%s1 + $0x68] sm:$0xff]
  %v70 = vld [vmem:[%s1 + $0x70] sm:$0xff]
  %v71 = vld [vmem:[%s1 + $0x78] sm:$0xff]
  %v72 = vld [vmem:[%s1 + $0x80] sm:$0xff]
  %v73 = vld [vmem:[%s1 + $0x88] sm:$0xff]
  %v74 = vld [vmem:[%s1 + $0x90] sm:$0xff]
  %v75 = vld [vmem:[%s1 + $0x98] sm:$0xff]
  %v76 = vld [vmem:[%s1 + $0xa0] sm:$0x77]
  %v77 = vld [vmem:[%s2] sm:$0xff]
  %v78 = vld [vmem:[%s2 + $0x8] sm:$0xff]
  %v79 = vld [vmem:[%s2 + $0x10] sm:$0xff]
  %v80 = vld [vmem:[%s2 + $0x18] sm:$0xff]
  %v81 = vld [vmem:[%s2 + $0x20] sm:$0xff]
  %v82 = vld [vmem:[%s2 + $0x28] sm:$0xff]
  %v83 = vld [vmem:[%s2 + $0x30] sm:$0xff]
  %v84 = vld [vmem:[%s2 + $0x38] sm:$0xff]
  %v85 = vld [vmem:[%s2 + $0x40] sm:$0xff]
  %v86 = vld [vmem:[%s2 + $0x48] sm:$0xff]
  %v87 = vld [vmem:[%s2 + $0x50] sm:$0xff]
  %v88 = vld [vmem:[%s2 + $0x58] sm:$0xff]
  %v89 = vld [vmem:[%s2 + $0x60] sm:$0xff]
  %v90 = vld [vmem:[%s2 + $0x68] sm:$0xff]
  %v91 = vld [vmem:[%s2 + $0x70] sm:$0xff]
  %v92 = vld [vmem:[%s2 + $0x78] sm:$0xff]
  %v93 = vld [vmem:[%s2 + $0x80] sm:$0xff]
  %v94 = vld [vmem:[%s2 + $0x88] sm:$0xff]
  %v95 = vld [vmem:[%s2 + $0x90] sm:$0xff]
  %v96 = vld [vmem:[%s2 + $0x98] sm:$0xff]
  %v97 = vld [vmem:[%s2 + $0xa0] sm:$0x3f]
  %99 = vset.pattern.permute.xlu0 0
  %100 = vperm.xlu0 %99, %v77
  %v101 = vpop.permute.xlu0 %100
  %104 = vset.pattern.permute.xlu0 0
  %105 = vperm.xlu0 %104, %v78
  %v106 = vpop.permute.xlu0 %105
  %109 = vset.pattern.permute.xlu0 0
  %110 = vperm.xlu0 %109, %v79
  %v111 = vpop.permute.xlu0 %110
  %114 = vset.pattern.permute.xlu0 0
  %115 = vperm.xlu0 %114, %v80
  %v116 = vpop.permute.xlu0 %115
  %119 = vset.pattern.permute.xlu0 0
  %120 = vperm.xlu0 %119, %v81
  %v121 = vpop.permute.xlu0 %120
  %124 = vset.pattern.permute.xlu0 0
  %125 = vperm.xlu0 %124, %v82
  %v126 = vpop.permute.xlu0 %125
  %129 = vset.pattern.permute.xlu0 0
  %130 = vperm.xlu0 %129, %v83
  %v131 = vpop.permute.xlu0 %130
  %134 = vset.pattern.permute.xlu0 0
  %135 = vperm.xlu0 %134, %v84
  %v136 = vpop.permute.xlu0 %135
  %139 = vset.pattern.permute.xlu0 0
  %140 = vperm.xlu0 %139, %v85
  %v141 = vpop.permute.xlu0 %140
  %144 = vset.pattern.permute.xlu0 0
  %145 = vperm.xlu0 %144, %v86
  %v146 = vpop.permute.xlu0 %145
  %149 = vset.pattern.permute.xlu0 0
  %150 = vperm.xlu0 %149, %v87
  %v151 = vpop.permute.xlu0 %150
  %154 = vset.pattern.permute.xlu0 0
  %155 = vperm.xlu0 %154, %v88
  %v156 = vpop.permute.xlu0 %155
  %159 = vset.pattern.permute.xlu0 0
  %160 = vperm.xlu0 %159, %v89
  %v161 = vpop.permute.xlu0 %160
  %164 = vset.pattern.permute.xlu0 0
  %165 = vperm.xlu0 %164, %v90
  %v166 = vpop.permute.xlu0 %165
  %169 = vset.pattern.permute.xlu0 0
  %170 = vperm.xlu0 %169, %v91
  %v171 = vpop.permute.xlu0 %170
  %174 = vset.pattern.permute.xlu0 0
  %175 = vperm.xlu0 %174, %v92
  %v176 = vpop.permute.xlu0 %175
  %179 = vset.pattern.permute.xlu0 0
  %180 = vperm.xlu0 %179, %v93
  %v181 = vpop.permute.xlu0 %180
  %184 = vset.pattern.permute.xlu0 0
  %185 = vperm.xlu0 %184, %v94
  %v186 = vpop.permute.xlu0 %185
  %189 = vset.pattern.permute.xlu0 0
  %190 = vperm.xlu0 %189, %v95
  %v191 = vpop.permute.xlu0 %190
  %194 = vset.pattern.permute.xlu0 0
  %195 = vperm.xlu0 %194, %v96
  %v196 = vpop.permute.xlu0 %195
  %199 = vset.pattern.permute.xlu0 0
  %200 = vperm.xlu0 %199, %v97
  %v201 = vpop.permute.xlu0 %200
  %v224 = vunpack.c.l.b16 %v56
  %v225 = vunpack.c.h.b16 %v56
  %v226 = vunpack.c.l.b16 %v57
  %v227 = vunpack.c.h.b16 %v57
  %v228 = vunpack.c.l.b16 %v58
  %v229 = vunpack.c.h.b16 %v58
  %v230 = vunpack.c.l.b16 %v59
  %v231 = vunpack.c.h.b16 %v59
  %v232 = vunpack.c.l.b16 %v60
  %v233 = vunpack.c.h.b16 %v60
  %v234 = vunpack.c.l.b16 %v61
  %v235 = vunpack.c.h.b16 %v61
  %v236 = vunpack.c.l.b16 %v62
  %v237 = vunpack.c.h.b16 %v62
  %v238 = vunpack.c.l.b16 %v63
  %v239 = vunpack.c.h.b16 %v63
  %v240 = vunpack.c.l.b16 %v64
  %v241 = vunpack.c.h.b16 %v64
  %v242 = vunpack.c.l.b16 %v65
  %v243 = vunpack.c.h.b16 %v65
  %v244 = vunpack.c.l.b16 %v66
  %v245 = vunpack.c.h.b16 %v66
  %v246 = vunpack.c.l.b16 %v67
  %v247 = vunpack.c.h.b16 %v67
  %v248 = vunpack.c.l.b16 %v68
  %v249 = vunpack.c.h.b16 %v68
  %v250 = vunpack.c.l.b16 %v69
  %v251 = vunpack.c.h.b16 %v69
  %v252 = vunpack.c.l.b16 %v70
  %v253 = vunpack.c.h.b16 %v70
  %v254 = vunpack.c.l.b16 %v71
  %v255 = vunpack.c.h.b16 %v71
  %v256 = vunpack.c.l.b16 %v72
  %v257 = vunpack.c.h.b16 %v72
  %v258 = vunpack.c.l.b16 %v73
  %v259 = vunpack.c.h.b16 %v73
  %v260 = vunpack.c.l.b16 %v74
  %v261 = vunpack.c.h.b16 %v74
  %v262 = vunpack.c.l.b16 %v75
  %v263 = vunpack.c.h.b16 %v75
  %v264 = vunpack.c.l.b16 %v76
  %v265 = vunpack.c.h.b16 %v76
  %v266 = vpack.c.b16 %v226, %v224
  %v267 = vpack.c.b16 %v227, %v225
  %v268 = vpack.c.b16 %v230, %v228
  %v269 = vpack.c.b16 %v231, %v229
  %v270 = vpack.c.b16 %v234, %v232
  %v271 = vpack.c.b16 %v235, %v233
  %v272 = vpack.c.b16 %v238, %v236
  %v273 = vpack.c.b16 %v239, %v237
  %v274 = vpack.c.b16 %v242, %v240
  %v275 = vpack.c.b16 %v243, %v241
  %v276 = vpack.c.b16 %v246, %v244
  %v277 = vpack.c.b16 %v247, %v245
  %v278 = vpack.c.b16 %v250, %v248
  %v279 = vpack.c.b16 %v251, %v249
  %v280 = vpack.c.b16 %v254, %v252
  %v281 = vpack.c.b16 %v255, %v253
  %v282 = vpack.c.b16 %v258, %v256
  %v283 = vpack.c.b16 %v259, %v257
  %v284 = vpack.c.b16 %v262, %v260
  %v285 = vpack.c.b16 %v263, %v261
  %v286 = vpack.c.b16 %v264, %v264
  %v287 = vpack.c.b16 %v265, %v265
  %v320 = vunpack.c.l.b16 %v35
  %v321 = vunpack.c.h.b16 %v35
  %v322 = vunpack.c.l.b16 %v36
  %v323 = vunpack.c.h.b16 %v36
  %v324 = vunpack.c.l.b16 %v37
  %v325 = vunpack.c.h.b16 %v37
  %v326 = vunpack.c.l.b16 %v38
  %v327 = vunpack.c.h.b16 %v38
  %v328 = vunpack.c.l.b16 %v39
  %v329 = vunpack.c.h.b16 %v39
  %v330 = vunpack.c.l.b16 %v40
  %v331 = vunpack.c.h.b16 %v40
  %v332 = vunpack.c.l.b16 %v41
  %v333 = vunpack.c.h.b16 %v41
  %v334 = vunpack.c.l.b16 %v42
  %v335 = vunpack.c.h.b16 %v42
  %v336 = vunpack.c.l.b16 %v43
  %v337 = vunpack.c.h.b16 %v43
  %v338 = vunpack.c.l.b16 %v44
  %v339 = vunpack.c.h.b16 %v44
  %v340 = vunpack.c.l.b16 %v45
  %v341 = vunpack.c.h.b16 %v45
  %v342 = vunpack.c.l.b16 %v46
  %v343 = vunpack.c.h.b16 %v46
  %v344 = vunpack.c.l.b16 %v47
  %v345 = vunpack.c.h.b16 %v47
  %v346 = vunpack.c.l.b16 %v48
  %v347 = vunpack.c.h.b16 %v48
  %v348 = vunpack.c.l.b16 %v49
  %v349 = vunpack.c.h.b16 %v49
  %v350 = vunpack.c.l.b16 %v50
  %v351 = vunpack.c.h.b16 %v50
  %v352 = vunpack.c.l.b16 %v51
  %v353 = vunpack.c.h.b16 %v51
  %v354 = vunpack.c.l.b16 %v52
  %v355 = vunpack.c.h.b16 %v52
  %v356 = vunpack.c.l.b16 %v53
  %v357 = vunpack.c.h.b16 %v53
  %v358 = vunpack.c.l.b16 %v54
  %v359 = vunpack.c.h.b16 %v54
  %v360 = vunpack.c.l.b16 %v55
  %v361 = vunpack.c.h.b16 %v55
  %v362 = vpack.c.b16 %v322, %v320
  %v363 = vpack.c.b16 %v323, %v321
  %v364 = vpack.c.b16 %v326, %v324
  %v365 = vpack.c.b16 %v327, %v325
  %v366 = vpack.c.b16 %v330, %v328
  %v367 = vpack.c.b16 %v331, %v329
  %v368 = vpack.c.b16 %v334, %v332
  %v369 = vpack.c.b16 %v335, %v333
  %v370 = vpack.c.b16 %v338, %v336
  %v371 = vpack.c.b16 %v339, %v337
  %v372 = vpack.c.b16 %v342, %v340
  %v373 = vpack.c.b16 %v343, %v341
  %v374 = vpack.c.b16 %v346, %v344
  %v375 = vpack.c.b16 %v347, %v345
  %v376 = vpack.c.b16 %v350, %v348
  %v377 = vpack.c.b16 %v351, %v349
  %v378 = vpack.c.b16 %v354, %v352
  %v379 = vpack.c.b16 %v355, %v353
  %v380 = vpack.c.b16 %v358, %v356
  %v381 = vpack.c.b16 %v359, %v357
  %v382 = vpack.c.b16 %v360, %v360
  %v383 = vpack.c.b16 %v361, %v361
  %vm404 = vcmask 310272
  %v406 = vsel %vm404, %v267, 0
  %v409 = vsel %vm404, %v269, 0
  %v412 = vsel %vm404, %v271, 0
  %v415 = vsel %vm404, %v273, 0
  %v418 = vsel %vm404, %v275, 0
  %v421 = vsel %vm404, %v277, 0
  %v424 = vsel %vm404, %v279, 0
  %v427 = vsel %vm404, %v281, 0
  %v430 = vsel %vm404, %v283, 0
  %v433 = vsel %vm404, %v285, 0
  %v436 = vsel %vm404, %v287, 0
  %vm438 = vcmask 1042432
  %v440 = vsel %vm438, %v382, 0
  %v443 = vsel %vm438, %v383, 0
  %445 = vmatprep.subr.bf16.mxu0 %v377
  %446 = vmatpush1.bf16.msra.mxu0 %v376
  %447 = vmatprep.subr.bf16.mxu0 %v375
  %448 = vmatpush1.bf16.msra.mxu0 %v374
  %449 = vmatprep.subr.bf16.mxu0 %v373
  %450 = vmatpush1.bf16.msra.mxu0 %v372
  %451 = vmatprep.subr.bf16.mxu0 %v371
  %452 = vmatpush1.bf16.msra.mxu0 %v370
  %453 = vmatprep.subr.bf16.mxu0 %v369
  %454 = vmatpush1.bf16.msra.mxu0 %v368
  %455 = vmatprep.subr.bf16.mxu0 %v367
  %456 = vmatpush1.bf16.msra.mxu0 %v366
  %457 = vmatprep.subr.bf16.mxu0 %v365
  %458 = vmatpush1.bf16.msra.mxu0 %v364
  %459 = vmatprep.subr.bf16.mxu0 %v363
  %460 = vmatpush1.bf16.msra.mxu0 %v362
  %461 = vmatprep.subr.bf16.mxu0 0
  %462 = vmatpush2.bf16.msra.mxu0 0
  %463 = vmatprep.subr.bf16.mxu0 0
  %464 = vmatpush2.bf16.msra.mxu0 0
  %465 = vmatprep.subr.bf16.mxu0 0
  %466 = vmatpush2.bf16.msra.mxu0 0
  %467 = vmatprep.subr.bf16.mxu0 0
  %468 = vmatpush2.bf16.msra.mxu0 0
  %469 = vmatprep.subr.bf16.mxu0 0
  %470 = vmatpush2.bf16.msra.mxu0 0
  %471 = vmatprep.subr.bf16.mxu0 %v443
  %472 = vmatpush2.bf16.msra.mxu0 %v440
  %473 = vmatprep.subr.bf16.mxu0 %v381
  %474 = vmatpush2.bf16.msra.mxu0 %v380
  %475 = vmatprep.subr.bf16.mxu0 %v379
  %476 = vmatpush2.bf16.msra.mxu0 %v378
  %477 = vmatprep.mubr.bf16.mxu0 %v406
  %478 = vmatmul.mubr.bf16.gmra.mxu0 %v266
  %v479 = vpop.f32.mrf.mxu0
  %v480 = vadd.f32 %v101, %v479
  %v481 = vpop.f32.mrf.mxu0
  %v482 = vadd.f32 %v101, %v481
  %v483 = vpop.f32.mrf.mxu0
  %v484 = vadd.f32 %v106, %v483
  %v485 = vpop.f32.mrf.mxu0
  %v486 = vadd.f32 %v106, %v485
  %487 = vmatprep.mubr.bf16.mxu0 %v409
  %488 = vmatmul.mubr.bf16.gmra.mxu0 %v268
  %v489 = vpop.f32.mrf.mxu0
  %v490 = vadd.f32 %v111, %v489
  %v491 = vpop.f32.mrf.mxu0
  %v492 = vadd.f32 %v111, %v491
  %v493 = vpop.f32.mrf.mxu0
  %v494 = vadd.f32 %v116, %v493
  %v495 = vpop.f32.mrf.mxu0
  %v496 = vadd.f32 %v116, %v495
  %497 = vmatprep.mubr.bf16.mxu0 %v412
  %498 = vmatmul.mubr.bf16.gmra.mxu0 %v270
  %v499 = vpop.f32.mrf.mxu0
  %v500 = vadd.f32 %v121, %v499
  %v501 = vpop.f32.mrf.mxu0
  %v502 = vadd.f32 %v121, %v501
  %v503 = vpop.f32.mrf.mxu0
  %v504 = vadd.f32 %v126, %v503
  %v505 = vpop.f32.mrf.mxu0
  %v506 = vadd.f32 %v126, %v505
  %507 = vmatprep.mubr.bf16.mxu0 %v415
  %508 = vmatmul.mubr.bf16.gmra.mxu0 %v272
  %v509 = vpop.f32.mrf.mxu0
  %v510 = vadd.f32 %v131, %v509
  %v511 = vpop.f32.mrf.mxu0
  %v512 = vadd.f32 %v131, %v511
  %v513 = vpop.f32.mrf.mxu0
  %v514 = vadd.f32 %v136, %v513
  %v515 = vpop.f32.mrf.mxu0
  %v516 = vadd.f32 %v136, %v515
  %517 = vmatprep.mubr.bf16.mxu0 %v418
  %518 = vmatmul.mubr.bf16.gmra.mxu0 %v274
  %v519 = vpop.f32.mrf.mxu0
  %v520 = vadd.f32 %v141, %v519
  %v521 = vpop.f32.mrf.mxu0
  %v522 = vadd.f32 %v141, %v521
  %v523 = vpop.f32.mrf.mxu0
  %v524 = vadd.f32 %v146, %v523
  %v525 = vpop.f32.mrf.mxu0
  %v526 = vadd.f32 %v146, %v525
  %527 = vmatprep.mubr.bf16.mxu0 %v421
  %528 = vmatmul.mubr.bf16.gmra.mxu0 %v276
  %v529 = vpop.f32.mrf.mxu0
  %v530 = vadd.f32 %v151, %v529
  %v531 = vpop.f32.mrf.mxu0
  %v532 = vadd.f32 %v151, %v531
  %v533 = vpop.f32.mrf.mxu0
  %v534 = vadd.f32 %v156, %v533
  %v535 = vpop.f32.mrf.mxu0
  %v536 = vadd.f32 %v156, %v535
  %537 = vmatprep.mubr.bf16.mxu0 %v424
  %538 = vmatmul.mubr.bf16.gmra.mxu0 %v278
  %v539 = vpop.f32.mrf.mxu0
  %v540 = vadd.f32 %v161, %v539
  %v541 = vpop.f32.mrf.mxu0
  %v542 = vadd.f32 %v161, %v541
  %v543 = vpop.f32.mrf.mxu0
  %v544 = vadd.f32 %v166, %v543
  %v545 = vpop.f32.mrf.mxu0
  %v546 = vadd.f32 %v166, %v545
  %547 = vmatprep.mubr.bf16.mxu0 %v427
  %548 = vmatmul.mubr.bf16.gmra.mxu0 %v280
  %v549 = vpop.f32.mrf.mxu0
  %v550 = vadd.f32 %v171, %v549
  %v551 = vpop.f32.mrf.mxu0
  %v552 = vadd.f32 %v171, %v551
  %v553 = vpop.f32.mrf.mxu0
  %v554 = vadd.f32 %v176, %v553
  %v555 = vpop.f32.mrf.mxu0
  %v556 = vadd.f32 %v176, %v555
  %557 = vmatprep.mubr.bf16.mxu0 %v430
  %558 = vmatmul.mubr.bf16.gmra.mxu0 %v282
  %v559 = vpop.f32.mrf.mxu0
  %v560 = vadd.f32 %v181, %v559
  %v561 = vpop.f32.mrf.mxu0
  %v562 = vadd.f32 %v181, %v561
  %v563 = vpop.f32.mrf.mxu0
  %v564 = vadd.f32 %v186, %v563
  %v565 = vpop.f32.mrf.mxu0
  %v566 = vadd.f32 %v186, %v565
  %567 = vmatprep.mubr.bf16.mxu0 %v433
  %568 = vmatmul.mubr.bf16.gmra.mxu0 %v284
  %v569 = vpop.f32.mrf.mxu0
  %v570 = vadd.f32 %v191, %v569
  %v571 = vpop.f32.mrf.mxu0
  %v572 = vadd.f32 %v191, %v571
  %v573 = vpop.f32.mrf.mxu0
  %v574 = vadd.f32 %v196, %v573
  %v575 = vpop.f32.mrf.mxu0
  %v576 = vadd.f32 %v196, %v575
  %577 = vmatprep.mubr.bf16.mxu0 %v436
  %578 = vmatmul.mubr.bf16.gmra.mxu0 %v286
  %v579 = vpop.f32.mrf.mxu0
  %v580 = vadd.f32 %v201, %v579
  %v581 = vpop.f32.mrf.mxu0
  %v582 = vadd.f32 %v201, %v581
  %v583 = vpop.f32.mrf.mxu0
  %v584 = vpop.f32.mrf.mxu0
  %585 = vdwg.mxu0
  %v586 = vmax.f32 %v480, 0.0
  %v587 = vmax.f32 %v482, 0.0
  %v588 = vmax.f32 %v484, 0.0
  %v589 = vmax.f32 %v486, 0.0
  %v590 = vmax.f32 %v490, 0.0
  %v591 = vmax.f32 %v492, 0.0
  %v592 = vmax.f32 %v494, 0.0
  %v593 = vmax.f32 %v496, 0.0
  %v594 = vmax.f32 %v500, 0.0
  %v595 = vmax.f32 %v502, 0.0
  %v596 = vmax.f32 %v504, 0.0
  %v597 = vmax.f32 %v506, 0.0
  %v598 = vmax.f32 %v510, 0.0
  %v599 = vmax.f32 %v512, 0.0
  %v600 = vmax.f32 %v514, 0.0
  %v601 = vmax.f32 %v516, 0.0
  %v602 = vmax.f32 %v520, 0.0
  %v603 = vmax.f32 %v522, 0.0
  %v604 = vmax.f32 %v524, 0.0
  %v605 = vmax.f32 %v526, 0.0
  %v606 = vmax.f32 %v530, 0.0
  %v607 = vmax.f32 %v532, 0.0
  %v608 = vmax.f32 %v534, 0.0
  %v609 = vmax.f32 %v536, 0.0
  %v610 = vmax.f32 %v540, 0.0
  %v611 = vmax.f32 %v542, 0.0
  %v612 = vmax.f32 %v544, 0.0
  %v613 = vmax.f32 %v546, 0.0
  %v614 = vmax.f32 %v550, 0.0
  %v615 = vmax.f32 %v552, 0.0
  %v616 = vmax.f32 %v554, 0.0
  %v617 = vmax.f32 %v556, 0.0
  %v618 = vmax.f32 %v560, 0.0
  %v619 = vmax.f32 %v562, 0.0
  %v620 = vmax.f32 %v564, 0.0
  %v621 = vmax.f32 %v566, 0.0
  %v622 = vmax.f32 %v570, 0.0
  %v623 = vmax.f32 %v572, 0.0
  %v624 = vmax.f32 %v574, 0.0
  %v625 = vmax.f32 %v576, 0.0
  %v626 = vmax.f32 %v580, 0.0
  %v627 = vmax.f32 %v582, 0.0
  %v628 = vld [vmem:[%s3] sm:$0xff]
  %v629 = vld [vmem:[%s3 + $0x8] sm:$0xff]
  %v630 = vld [vmem:[%s3 + $0x10] sm:$0xff]
  %v631 = vld [vmem:[%s3 + $0x18] sm:$0xff]
  %v632 = vld [vmem:[%s3 + $0x20] sm:$0xff]
  %v633 = vld [vmem:[%s3 + $0x28] sm:$0xff]
  %v634 = vld [vmem:[%s3 + $0x30] sm:$0xff]
  %v635 = vld [vmem:[%s3 + $0x38] sm:$0xff]
  %v636 = vld [vmem:[%s3 + $0x40] sm:$0xff]
  %v637 = vld [vmem:[%s3 + $0x48] sm:$0xff]
  %v638 = vld [vmem:[%s3 + $0x50] sm:$0xff]
  %v639 = vld [vmem:[%s3 + $0x58] sm:$0xff]
  %v640 = vld [vmem:[%s3 + $0x60] sm:$0xff]
  %v641 = vld [vmem:[%s3 + $0x68] sm:$0xff]
  %v642 = vld [vmem:[%s3 + $0x70] sm:$0xff]
  %v643 = vld [vmem:[%s3 + $0x78] sm:$0xff]
  %v644 = vld [vmem:[%s3 + $0x80] sm:$0xff]
  %v645 = vld [vmem:[%s3 + $0x88] sm:$0xff]
  %v646 = vld [vmem:[%s3 + $0x90] sm:$0xff]
  %v647 = vld [vmem:[%s3 + $0x98] sm:$0xff]
  %v648 = vld [vmem:[%s3 + $0xa0] sm:$0x77]
  %v649 = vpack.c.bf16 %v588, %v586
  %v650 = vpack.c.bf16 %v589, %v587
  %v651 = vpack.c.bf16 %v592, %v590
  %v652 = vpack.c.bf16 %v593, %v591
  %v653 = vpack.c.bf16 %v596, %v594
  %v654 = vpack.c.bf16 %v597, %v595
  %v655 = vpack.c.bf16 %v600, %v598
  %v656 = vpack.c.bf16 %v601, %v599
  %v657 = vpack.c.bf16 %v604, %v602
  %v658 = vpack.c.bf16 %v605, %v603
  %v659 = vpack.c.bf16 %v608, %v606
  %v660 = vpack.c.bf16 %v609, %v607
  %v661 = vpack.c.bf16 %v612, %v610
  %v662 = vpack.c.bf16 %v613, %v611
  %v663 = vpack.c.bf16 %v616, %v614
  %v664 = vpack.c.bf16 %v617, %v615
  %v665 = vpack.c.bf16 %v620, %v618
  %v666 = vpack.c.bf16 %v621, %v619
  %v667 = vpack.c.bf16 %v624, %v622
  %v668 = vpack.c.bf16 %v625, %v623
  %v669 = vpack.c.bf16 %v626, %v626
  %v670 = vpack.c.bf16 %v627, %v627
  %v671 = vld [vmem:[%s4] sm:$0xff]
  %v672 = vld [vmem:[%s4 + $0x8] sm:$0xff]
  %v673 = vld [vmem:[%s4 + $0x10] sm:$0xff]
  %v674 = vld [vmem:[%s4 + $0x18] sm:$0xff]
  %v675 = vld [vmem:[%s4 + $0x20] sm:$0xff]
  %v676 = vld [vmem:[%s4 + $0x28] sm:$0xff]
  %v677 = vld [vmem:[%s4 + $0x30] sm:$0xff]
  %v678 = vld [vmem:[%s4 + $0x38] sm:$0xff]
  %v679 = vld [vmem:[%s4 + $0x40] sm:$0xff]
  %v680 = vld [vmem:[%s4 + $0x48] sm:$0xff]
  %v681 = vld [vmem:[%s4 + $0x50] sm:$0xff]
  %v682 = vld [vmem:[%s4 + $0x58] sm:$0xff]
  %v683 = vld [vmem:[%s4 + $0x60] sm:$0xff]
  %v684 = vld [vmem:[%s4 + $0x68] sm:$0xff]
  %v685 = vld [vmem:[%s4 + $0x70] sm:$0xff]
  %v686 = vld [vmem:[%s4 + $0x78] sm:$0xff]
  %v687 = vld [vmem:[%s4 + $0x80] sm:$0xff]
  %v688 = vld [vmem:[%s4 + $0x88] sm:$0xff]
  %v689 = vld [vmem:[%s4 + $0x90] sm:$0xff]
  %v690 = vld [vmem:[%s4 + $0x98] sm:$0xff]
  %v691 = vld [vmem:[%s4 + $0xa0] sm:$0x3f]
  %693 = vset.pattern.permute.xlu0 0
  %694 = vperm.xlu0 %693, %v671
  %v695 = vpop.permute.xlu0 %694
  %698 = vset.pattern.permute.xlu0 0
  %699 = vperm.xlu0 %698, %v672
  %v700 = vpop.permute.xlu0 %699
  %703 = vset.pattern.permute.xlu0 0
  %704 = vperm.xlu0 %703, %v673
  %v705 = vpop.permute.xlu0 %704
  %708 = vset.pattern.permute.xlu0 0
  %709 = vperm.xlu0 %708, %v674
  %v710 = vpop.permute.xlu0 %709
  %713 = vset.pattern.permute.xlu0 0
  %714 = vperm.xlu0 %713, %v675
  %v715 = vpop.permute.xlu0 %714
  %718 = vset.pattern.permute.xlu0 0
  %719 = vperm.xlu0 %718, %v676
  %v720 = vpop.permute.xlu0 %719
  %723 = vset.pattern.permute.xlu0 0
  %724 = vperm.xlu0 %723, %v677
  %v725 = vpop.permute.xlu0 %724
  %728 = vset.pattern.permute.xlu0 0
  %729 = vperm.xlu0 %728, %v678
  %v730 = vpop.permute.xlu0 %729
  %733 = vset.pattern.permute.xlu0 0
  %734 = vperm.xlu0 %733, %v679
  %v735 = vpop.permute.xlu0 %734
  %738 = vset.pattern.permute.xlu0 0
  %739 = vperm.xlu0 %738, %v680
  %v740 = vpop.permute.xlu0 %739
  %743 = vset.pattern.permute.xlu0 0
  %744 = vperm.xlu0 %743, %v681
  %v745 = vpop.permute.xlu0 %744
  %748 = vset.pattern.permute.xlu0 0
  %749 = vperm.xlu0 %748, %v682
  %v750 = vpop.permute.xlu0 %749
  %753 = vset.pattern.permute.xlu0 0
  %754 = vperm.xlu0 %753, %v683
  %v755 = vpop.permute.xlu0 %754
  %758 = vset.pattern.permute.xlu0 0
  %759 = vperm.xlu0 %758, %v684
  %v760 = vpop.permute.xlu0 %759
  %763 = vset.pattern.permute.xlu0 0
  %764 = vperm.xlu0 %763, %v685
  %v765 = vpop.permute.xlu0 %764
  %768 = vset.pattern.permute.xlu0 0
  %769 = vperm.xlu0 %768, %v686
  %v770 = vpop.permute.xlu0 %769
  %773 = vset.pattern.permute.xlu0 0
  %774 = vperm.xlu0 %773, %v687
  %v775 = vpop.permute.xlu0 %774
  %778 = vset.pattern.permute.xlu0 0
  %779 = vperm.xlu0 %778, %v688
  %v780 = vpop.permute.xlu0 %779
  %783 = vset.pattern.permute.xlu0 0
  %784 = vperm.xlu0 %783, %v689
  %v785 = vpop.permute.xlu0 %784
  %788 = vset.pattern.permute.xlu0 0
  %789 = vperm.xlu0 %788, %v690
  %v790 = vpop.permute.xlu0 %789
  %793 = vset.pattern.permute.xlu0 0
  %794 = vperm.xlu0 %793, %v691
  %v795 = vpop.permute.xlu0 %794
  %v818 = vunpack.c.l.b16 %v628
  %v819 = vunpack.c.h.b16 %v628
  %v820 = vunpack.c.l.b16 %v629
  %v821 = vunpack.c.h.b16 %v629
  %v822 = vunpack.c.l.b16 %v630
  %v823 = vunpack.c.h.b16 %v630
  %v824 = vunpack.c.l.b16 %v631
  %v825 = vunpack.c.h.b16 %v631
  %v826 = vunpack.c.l.b16 %v632
  %v827 = vunpack.c.h.b16 %v632
  %v828 = vunpack.c.l.b16 %v633
  %v829 = vunpack.c.h.b16 %v633
  %v830 = vunpack.c.l.b16 %v634
  %v831 = vunpack.c.h.b16 %v634
  %v832 = vunpack.c.l.b16 %v635
  %v833 = vunpack.c.h.b16 %v635
  %v834 = vunpack.c.l.b16 %v636
  %v835 = vunpack.c.h.b16 %v636
  %v836 = vunpack.c.l.b16 %v637
  %v837 = vunpack.c.h.b16 %v637
  %v838 = vunpack.c.l.b16 %v638
  %v839 = vunpack.c.h.b16 %v638
  %v840 = vunpack.c.l.b16 %v639
  %v841 = vunpack.c.h.b16 %v639
  %v842 = vunpack.c.l.b16 %v640
  %v843 = vunpack.c.h.b16 %v640
  %v844 = vunpack.c.l.b16 %v641
  %v845 = vunpack.c.h.b16 %v641
  %v846 = vunpack.c.l.b16 %v642
  %v847 = vunpack.c.h.b16 %v642
  %v848 = vunpack.c.l.b16 %v643
  %v849 = vunpack.c.h.b16 %v643
  %v850 = vunpack.c.l.b16 %v644
  %v851 = vunpack.c.h.b16 %v644
  %v852 = vunpack.c.l.b16 %v645
  %v853 = vunpack.c.h.b16 %v645
  %v854 = vunpack.c.l.b16 %v646
  %v855 = vunpack.c.h.b16 %v646
  %v856 = vunpack.c.l.b16 %v647
  %v857 = vunpack.c.h.b16 %v647
  %v858 = vunpack.c.l.b16 %v648
  %v859 = vunpack.c.h.b16 %v648
  %v860 = vpack.c.b16 %v820, %v818
  %v861 = vpack.c.b16 %v821, %v819
  %v862 = vpack.c.b16 %v824, %v822
  %v863 = vpack.c.b16 %v825, %v823
  %v864 = vpack.c.b16 %v828, %v826
  %v865 = vpack.c.b16 %v829, %v827
  %v866 = vpack.c.b16 %v832, %v830
  %v867 = vpack.c.b16 %v833, %v831
  %v868 = vpack.c.b16 %v836, %v834
  %v869 = vpack.c.b16 %v837, %v835
  %v870 = vpack.c.b16 %v840, %v838
  %v871 = vpack.c.b16 %v841, %v839
  %v872 = vpack.c.b16 %v844, %v842
  %v873 = vpack.c.b16 %v845, %v843
  %v874 = vpack.c.b16 %v848, %v846
  %v875 = vpack.c.b16 %v849, %v847
  %v876 = vpack.c.b16 %v852, %v850
  %v877 = vpack.c.b16 %v853, %v851
  %v878 = vpack.c.b16 %v856, %v854
  %v879 = vpack.c.b16 %v857, %v855
  %v880 = vpack.c.b16 %v858, %v858
  %v881 = vpack.c.b16 %v859, %v859
  %v894 = vsel %vm404, %v861, 0
  %v897 = vsel %vm404, %v863, 0
  %v900 = vsel %vm404, %v865, 0
  %v903 = vsel %vm404, %v867, 0
  %v906 = vsel %vm404, %v869, 0
  %v909 = vsel %vm404, %v871, 0
  %v912 = vsel %vm404, %v873, 0
  %v915 = vsel %vm404, %v875, 0
  %v918 = vsel %vm404, %v877, 0
  %v921 = vsel %vm404, %v879, 0
  %v924 = vsel %vm404, %v881, 0
  %v927 = vsel %vm438, %v669, 0
  %v930 = vsel %vm438, %v670, 0
  %932 = vmatprep.subr.bf16.mxu0 %v664
  %933 = vmatpush1.bf16.msra.mxu0 %v663
  %934 = vmatprep.subr.bf16.mxu0 %v662
  %935 = vmatpush1.bf16.msra.mxu0 %v661
  %936 = vmatprep.subr.bf16.mxu0 %v660
  %937 = vmatpush1.bf16.msra.mxu0 %v659
  %938 = vmatprep.subr.bf16.mxu0 %v658
  %939 = vmatpush1.bf16.msra.mxu0 %v657
  %940 = vmatprep.subr.bf16.mxu0 %v656
  %941 = vmatpush1.bf16.msra.mxu0 %v655
  %942 = vmatprep.subr.bf16.mxu0 %v654
  %943 = vmatpush1.bf16.msra.mxu0 %v653
  %944 = vmatprep.subr.bf16.mxu0 %v652
  %945 = vmatpush1.bf16.msra.mxu0 %v651
  %946 = vmatprep.subr.bf16.mxu0 %v650
  %947 = vmatpush1.bf16.msra.mxu0 %v649
  %948 = vmatprep.subr.bf16.mxu0 0
  %949 = vmatpush2.bf16.msra.mxu0 0
  %950 = vmatprep.subr.bf16.mxu0 0
  %951 = vmatpush2.bf16.msra.mxu0 0
  %952 = vmatprep.subr.bf16.mxu0 0
  %953 = vmatpush2.bf16.msra.mxu0 0
  %954 = vmatprep.subr.bf16.mxu0 0
  %955 = vmatpush2.bf16.msra.mxu0 0
  %956 = vmatprep.subr.bf16.mxu0 0
  %957 = vmatpush2.bf16.msra.mxu0 0
  %958 = vmatprep.subr.bf16.mxu0 %v930
  %959 = vmatpush2.bf16.msra.mxu0 %v927
  %960 = vmatprep.subr.bf16.mxu0 %v668
  %961 = vmatpush2.bf16.msra.mxu0 %v667
  %962 = vmatprep.subr.bf16.mxu0 %v666
  %963 = vmatpush2.bf16.msra.mxu0 %v665
  %964 = vmatprep.mubr.bf16.mxu0 %v894
  %965 = vmatmul.mubr.bf16.gmra.mxu0 %v860
  %v966 = vpop.f32.mrf.mxu0
  %v967 = vadd.f32 %v695, %v966
  %v968 = vpop.f32.mrf.mxu0
  %v969 = vadd.f32 %v695, %v968
  %v970 = vpop.f32.mrf.mxu0
  %v971 = vadd.f32 %v700, %v970
  %v972 = vpop.f32.mrf.mxu0
  %v973 = vadd.f32 %v700, %v972
  %974 = vmatprep.mubr.bf16.mxu0 %v897
  %975 = vmatmul.mubr.bf16.gmra.mxu0 %v862
  %v976 = vpop.f32.mrf.mxu0
  %v977 = vadd.f32 %v705, %v976
  %v978 = vpop.f32.mrf.mxu0
  %v979 = vadd.f32 %v705, %v978
  %v980 = vpop.f32.mrf.mxu0
  %v981 = vadd.f32 %v710, %v980
  %v982 = vpop.f32.mrf.mxu0
  %v983 = vadd.f32 %v710, %v982
  %984 = vmatprep.mubr.bf16.mxu0 %v900
  %985 = vmatmul.mubr.bf16.gmra.mxu0 %v864
  %v986 = vpop.f32.mrf.mxu0
  %v987 = vadd.f32 %v715, %v986
  %v988 = vpop.f32.mrf.mxu0
  %v989 = vadd.f32 %v715, %v988
  %v990 = vpop.f32.mrf.mxu0
  %v991 = vadd.f32 %v720, %v990
  %v992 = vpop.f32.mrf.mxu0
  %v993 = vadd.f32 %v720, %v992
  %994 = vmatprep.mubr.bf16.mxu0 %v903
  %995 = vmatmul.mubr.bf16.gmra.mxu0 %v866
  %v996 = vpop.f32.mrf.mxu0
  %v997 = vadd.f32 %v725, %v996
  %v998 = vpop.f32.mrf.mxu0
  %v999 = vadd.f32 %v725, %v998
  %v1000 = vpop.f32.mrf.mxu0
  %v1001 = vadd.f32 %v730, %v1000
  %v1002 = vpop.f32.mrf.mxu0
  %v1003 = vadd.f32 %v730, %v1002
  %1004 = vmatprep.mubr.bf16.mxu0 %v906
  %1005 = vmatmul.mubr.bf16.gmra.mxu0 %v868
  %v1006 = vpop.f32.mrf.mxu0
  %v1007 = vadd.f32 %v735, %v1006
  %v1008 = vpop.f32.mrf.mxu0
  %v1009 = vadd.f32 %v735, %v1008
  %v1010 = vpop.f32.mrf.mxu0
  %v1011 = vadd.f32 %v740, %v1010
  %v1012 = vpop.f32.mrf.mxu0
  %v1013 = vadd.f32 %v740, %v1012
  %1014 = vmatprep.mubr.bf16.mxu0 %v909
  %1015 = vmatmul.mubr.bf16.gmra.mxu0 %v870
  %v1016 = vpop.f32.mrf.mxu0
  %v1017 = vadd.f32 %v745, %v1016
  %v1018 = vpop.f32.mrf.mxu0
  %v1019 = vadd.f32 %v745, %v1018
  %v1020 = vpop.f32.mrf.mxu0
  %v1021 = vadd.f32 %v750, %v1020
  %v1022 = vpop.f32.mrf.mxu0
  %v1023 = vadd.f32 %v750, %v1022
  %1024 = vmatprep.mubr.bf16.mxu0 %v912
  %1025 = vmatmul.mubr.bf16.gmra.mxu0 %v872
  %v1026 = vpop.f32.mrf.mxu0
  %v1027 = vadd.f32 %v755, %v1026
  %v1028 = vpop.f32.mrf.mxu0
  %v1029 = vadd.f32 %v755, %v1028
  %v1030 = vpop.f32.mrf.mxu0
  %v1031 = vadd.f32 %v760, %v1030
  %v1032 = vpop.f32.mrf.mxu0
  %v1033 = vadd.f32 %v760, %v1032
  %1034 = vmatprep.mubr.bf16.mxu0 %v915
  %1035 = vmatmul.mubr.bf16.gmra.mxu0 %v874
  %v1036 = vpop.f32.mrf.mxu0
  %v1037 = vadd.f32 %v765, %v1036
  %v1038 = vpop.f32.mrf.mxu0
  %v1039 = vadd.f32 %v765, %v1038
  %v1040 = vpop.f32.mrf.mxu0
  %v1041 = vadd.f32 %v770, %v1040
  %v1042 = vpop.f32.mrf.mxu0
  %v1043 = vadd.f32 %v770, %v1042
  %1044 = vmatprep.mubr.bf16.mxu0 %v918
  %1045 = vmatmul.mubr.bf16.gmra.mxu0 %v876
  %v1046 = vpop.f32.mrf.mxu0
  %v1047 = vadd.f32 %v775, %v1046
  %v1048 = vpop.f32.mrf.mxu0
  %v1049 = vadd.f32 %v775, %v1048
  %v1050 = vpop.f32.mrf.mxu0
  %v1051 = vadd.f32 %v780, %v1050
  %v1052 = vpop.f32.mrf.mxu0
  %v1053 = vadd.f32 %v780, %v1052
  %1054 = vmatprep.mubr.bf16.mxu0 %v921
  %1055 = vmatmul.mubr.bf16.gmra.mxu0 %v878
  %v1056 = vpop.f32.mrf.mxu0
  %v1057 = vadd.f32 %v785, %v1056
  %v1058 = vpop.f32.mrf.mxu0
  %v1059 = vadd.f32 %v785, %v1058
  %v1060 = vpop.f32.mrf.mxu0
  %v1061 = vadd.f32 %v790, %v1060
  %v1062 = vpop.f32.mrf.mxu0
  %v1063 = vadd.f32 %v790, %v1062
  %1064 = vmatprep.mubr.bf16.mxu0 %v924
  %1065 = vmatmul.mubr.bf16.gmra.mxu0 %v880
  %v1066 = vpop.f32.mrf.mxu0
  %v1067 = vadd.f32 %v795, %v1066
  %v1068 = vpop.f32.mrf.mxu0
  %v1069 = vadd.f32 %v795, %v1068
  %v1070 = vpop.f32.mrf.mxu0
  %v1071 = vpop.f32.mrf.mxu0
  %1072 = vdwg.mxu0
  %v1073 = vmax.f32 %v967, 0.0
  %v1074 = vmax.f32 %v969, 0.0
  %v1075 = vmax.f32 %v971, 0.0
  %v1076 = vmax.f32 %v973, 0.0
  %v1077 = vmax.f32 %v977, 0.0
  %v1078 = vmax.f32 %v979, 0.0
  %v1079 = vmax.f32 %v981, 0.0
  %v1080 = vmax.f32 %v983, 0.0
  %v1081 = vmax.f32 %v987, 0.0
  %v1082 = vmax.f32 %v989, 0.0
  %v1083 = vmax.f32 %v991, 0.0
  %v1084 = vmax.f32 %v993, 0.0
  %v1085 = vmax.f32 %v997, 0.0
  %v1086 = vmax.f32 %v999, 0.0
  %v1087 = vmax.f32 %v1001, 0.0
  %v1088 = vmax.f32 %v1003, 0.0
  %v1089 = vmax.f32 %v1007, 0.0
  %v1090 = vmax.f32 %v1009, 0.0
  %v1091 = vmax.f32 %v1011, 0.0
  %v1092 = vmax.f32 %v1013, 0.0
  %v1093 = vmax.f32 %v1017, 0.0
  %v1094 = vmax.f32 %v1019, 0.0
  %v1095 = vmax.f32 %v1021, 0.0
  %v1096 = vmax.f32 %v1023, 0.0
  %v1097 = vmax.f32 %v1027, 0.0
  %v1098 = vmax.f32 %v1029, 0.0
  %v1099 = vmax.f32 %v1031, 0.0
  %v1100 = vmax.f32 %v1033, 0.0
  %v1101 = vmax.f32 %v1037, 0.0
  %v1102 = vmax.f32 %v1039, 0.0
  %v1103 = vmax.f32 %v1041, 0.0
  %v1104 = vmax.f32 %v1043, 0.0
  %v1105 = vmax.f32 %v1047, 0.0
  %v1106 = vmax.f32 %v1049, 0.0
  %v1107 = vmax.f32 %v1051, 0.0
  %v1108 = vmax.f32 %v1053, 0.0
  %v1109 = vmax.f32 %v1057, 0.0
  %v1110 = vmax.f32 %v1059, 0.0
  %v1111 = vmax.f32 %v1061, 0.0
  %v1112 = vmax.f32 %v1063, 0.0
  %v1113 = vmax.f32 %v1067, 0.0
  %v1114 = vmax.f32 %v1069, 0.0
  %v1115 = vld [vmem:[%s5] sm:$0xff]
  %v1116 = vld [vmem:[%s5 + $0x8] sm:$0xff]
  %v1117 = vld [vmem:[%s5 + $0x10] sm:$0xff]
  %v1118 = vld [vmem:[%s5 + $0x18] sm:$0xff]
  %v1119 = vld [vmem:[%s5 + $0x20] sm:$0xff]
  %v1120 = vld [vmem:[%s5 + $0x28] sm:$0xff]
  %v1121 = vld [vmem:[%s5 + $0x30] sm:$0xff]
  %v1122 = vld [vmem:[%s5 + $0x38] sm:$0xff]
  %v1123 = vld [vmem:[%s5 + $0x40] sm:$0xff]
  %v1124 = vld [vmem:[%s5 + $0x48] sm:$0xff]
  %v1125 = vld [vmem:[%s5 + $0x50] sm:$0x33]
  %v1126 = vpack.c.bf16 %v1075, %v1073
  %v1127 = vpack.c.bf16 %v1076, %v1074
  %v1128 = vpack.c.bf16 %v1079, %v1077
  %v1129 = vpack.c.bf16 %v1080, %v1078
  %v1130 = vpack.c.bf16 %v1083, %v1081
  %v1131 = vpack.c.bf16 %v1084, %v1082
  %v1132 = vpack.c.bf16 %v1087, %v1085
  %v1133 = vpack.c.bf16 %v1088, %v1086
  %v1134 = vpack.c.bf16 %v1091, %v1089
  %v1135 = vpack.c.bf16 %v1092, %v1090
  %v1136 = vpack.c.bf16 %v1095, %v1093
  %v1137 = vpack.c.bf16 %v1096, %v1094
  %v1138 = vpack.c.bf16 %v1099, %v1097
  %v1139 = vpack.c.bf16 %v1100, %v1098
  %v1140 = vpack.c.bf16 %v1103, %v1101
  %v1141 = vpack.c.bf16 %v1104, %v1102
  %v1142 = vpack.c.bf16 %v1107, %v1105
  %v1143 = vpack.c.bf16 %v1108, %v1106
  %v1144 = vpack.c.bf16 %v1111, %v1109
  %v1145 = vpack.c.bf16 %v1112, %v1110
  %v1146 = vpack.c.bf16 %v1113, %v1113
  %v1147 = vpack.c.bf16 %v1114, %v1114
  %v1148 = vld [vmem:[%s6] sm:$0xff]
  %v1149 = vld [vmem:[%s6 + $0x8] sm:$0xff]
  %v1150 = vld [vmem:[%s6 + $0x10] sm:$0xff]
  %v1151 = vld [vmem:[%s6 + $0x18] sm:$0xff]
  %v1152 = vld [vmem:[%s6 + $0x20] sm:$0xff]
  %v1153 = vld [vmem:[%s6 + $0x28] sm:$0xff]
  %v1154 = vld [vmem:[%s6 + $0x30] sm:$0xff]
  %v1155 = vld [vmem:[%s6 + $0x38] sm:$0xff]
  %v1156 = vld [vmem:[%s6 + $0x40] sm:$0xff]
  %v1157 = vld [vmem:[%s6 + $0x48] sm:$0xff]
  %v1158 = vld [vmem:[%s6 + $0x50] sm:$0x7]
  %1160 = vset.pattern.permute.xlu0 0
  %1161 = vperm.xlu0 %1160, %v1148
  %v1162 = vpop.permute.xlu0 %1161
  %1165 = vset.pattern.permute.xlu0 0
  %1166 = vperm.xlu0 %1165, %v1149
  %v1167 = vpop.permute.xlu0 %1166
  %1170 = vset.pattern.permute.xlu0 0
  %1171 = vperm.xlu0 %1170, %v1150
  %v1172 = vpop.permute.xlu0 %1171
  %1175 = vset.pattern.permute.xlu0 0
  %1176 = vperm.xlu0 %1175, %v1151
  %v1177 = vpop.permute.xlu0 %1176
  %1180 = vset.pattern.permute.xlu0 0
  %1181 = vperm.xlu0 %1180, %v1152
  %v1182 = vpop.permute.xlu0 %1181
  %1185 = vset.pattern.permute.xlu0 0
  %1186 = vperm.xlu0 %1185, %v1153
  %v1187 = vpop.permute.xlu0 %1186
  %1190 = vset.pattern.permute.xlu0 0
  %1191 = vperm.xlu0 %1190, %v1154
  %v1192 = vpop.permute.xlu0 %1191
  %1195 = vset.pattern.permute.xlu0 0
  %1196 = vperm.xlu0 %1195, %v1155
  %v1197 = vpop.permute.xlu0 %1196
  %1200 = vset.pattern.permute.xlu0 0
  %1201 = vperm.xlu0 %1200, %v1156
  %v1202 = vpop.permute.xlu0 %1201
  %1205 = vset.pattern.permute.xlu0 0
  %1206 = vperm.xlu0 %1205, %v1157
  %v1207 = vpop.permute.xlu0 %1206
  %1210 = vset.pattern.permute.xlu0 0
  %1211 = vperm.xlu0 %1210, %v1158
  %v1212 = vpop.permute.xlu0 %1211
  %v1225 = vunpack.c.l.b16 %v1115
  %v1226 = vunpack.c.h.b16 %v1115
  %v1227 = vunpack.c.l.b16 %v1116
  %v1228 = vunpack.c.h.b16 %v1116
  %v1229 = vunpack.c.l.b16 %v1117
  %v1230 = vunpack.c.h.b16 %v1117
  %v1231 = vunpack.c.l.b16 %v1118
  %v1232 = vunpack.c.h.b16 %v1118
  %v1233 = vunpack.c.l.b16 %v1119
  %v1234 = vunpack.c.h.b16 %v1119
  %v1235 = vunpack.c.l.b16 %v1120
  %v1236 = vunpack.c.h.b16 %v1120
  %v1237 = vunpack.c.l.b16 %v1121
  %v1238 = vunpack.c.h.b16 %v1121
  %v1239 = vunpack.c.l.b16 %v1122
  %v1240 = vunpack.c.h.b16 %v1122
  %v1241 = vunpack.c.l.b16 %v1123
  %v1242 = vunpack.c.h.b16 %v1123
  %v1243 = vunpack.c.l.b16 %v1124
  %v1244 = vunpack.c.h.b16 %v1124
  %v1245 = vunpack.c.l.b16 %v1125
  %v1246 = vunpack.c.h.b16 %v1125
  %v1247 = vpack.c.b16 %v1227, %v1225
  %v1248 = vpack.c.b16 %v1228, %v1226
  %v1249 = vpack.c.b16 %v1231, %v1229
  %v1250 = vpack.c.b16 %v1232, %v1230
  %v1251 = vpack.c.b16 %v1235, %v1233
  %v1252 = vpack.c.b16 %v1236, %v1234
  %v1253 = vpack.c.b16 %v1239, %v1237
  %v1254 = vpack.c.b16 %v1240, %v1238
  %v1255 = vpack.c.b16 %v1243, %v1241
  %v1256 = vpack.c.b16 %v1244, %v1242
  %v1257 = vpack.c.b16 %v1245, %v1245
  %v1258 = vpack.c.b16 %v1246, %v1246
  %v1266 = vsel %vm404, %v1248, 0
  %v1269 = vsel %vm404, %v1250, 0
  %v1272 = vsel %vm404, %v1252, 0
  %v1275 = vsel %vm404, %v1254, 0
  %v1278 = vsel %vm404, %v1256, 0
  %v1281 = vsel %vm404, %v1258, 0
  %v1284 = vsel %vm438, %v1146, 0
  %v1287 = vsel %vm438, %v1147, 0
  %1289 = vmatprep.subr.bf16.mxu0 %v1141
  %1290 = vmatpush1.bf16.msra.mxu0 %v1140
  %1291 = vmatprep.subr.bf16.mxu0 %v1139
  %1292 = vmatpush1.bf16.msra.mxu0 %v1138
  %1293 = vmatprep.subr.bf16.mxu0 %v1137
  %1294 = vmatpush1.bf16.msra.mxu0 %v1136
  %1295 = vmatprep.subr.bf16.mxu0 %v1135
  %1296 = vmatpush1.bf16.msra.mxu0 %v1134
  %1297 = vmatprep.subr.bf16.mxu0 %v1133
  %1298 = vmatpush1.bf16.msra.mxu0 %v1132
  %1299 = vmatprep.subr.bf16.mxu0 %v1131
  %1300 = vmatpush1.bf16.msra.mxu0 %v1130
  %1301 = vmatprep.subr.bf16.mxu0 %v1129
  %1302 = vmatpush1.bf16.msra.mxu0 %v1128
  %1303 = vmatprep.subr.bf16.mxu0 %v1127
  %1304 = vmatpush1.bf16.msra.mxu0 %v1126
  %1305 = vmatprep.subr.bf16.mxu0 0
  %1306 = vmatpush2.bf16.msra.mxu0 0
  %1307 = vmatprep.subr.bf16.mxu0 0
  %1308 = vmatpush2.bf16.msra.mxu0 0
  %1309 = vmatprep.subr.bf16.mxu0 0
  %1310 = vmatpush2.bf16.msra.mxu0 0
  %1311 = vmatprep.subr.bf16.mxu0 0
  %1312 = vmatpush2.bf16.msra.mxu0 0
  %1313 = vmatprep.subr.bf16.mxu0 0
  %1314 = vmatpush2.bf16.msra.mxu0 0
  %1315 = vmatprep.subr.bf16.mxu0 %v1287
  %1316 = vmatpush2.bf16.msra.mxu0 %v1284
  %1317 = vmatprep.subr.bf16.mxu0 %v1145
  %1318 = vmatpush2.bf16.msra.mxu0 %v1144
  %1319 = vmatprep.subr.bf16.mxu0 %v1143
  %1320 = vmatpush2.bf16.msra.mxu0 %v1142
  %1321 = vmatprep.mubr.bf16.mxu0 %v1266
  %1322 = vmatmul.mubr.bf16.gmra.mxu0 %v1247
  %v1323 = vpop.f32.mrf.mxu0
  %v1324 = vadd.f32 %v1162, %v1323
  %v1325 = vpop.f32.mrf.mxu0
  %v1326 = vadd.f32 %v1162, %v1325
  %v1327 = vpop.f32.mrf.mxu0
  %v1328 = vadd.f32 %v1167, %v1327
  %v1329 = vpop.f32.mrf.mxu0
  %v1330 = vadd.f32 %v1167, %v1329
  %1331 = vmatprep.mubr.bf16.mxu0 %v1269
  %1332 = vmatmul.mubr.bf16.gmra.mxu0 %v1249
  %v1333 = vpop.f32.mrf.mxu0
  %v1334 = vadd.f32 %v1172, %v1333
  %v1335 = vpop.f32.mrf.mxu0
  %v1336 = vadd.f32 %v1172, %v1335
  %v1337 = vpop.f32.mrf.mxu0
  %v1338 = vadd.f32 %v1177, %v1337
  %v1339 = vpop.f32.mrf.mxu0
  %v1340 = vadd.f32 %v1177, %v1339
  %1341 = vmatprep.mubr.bf16.mxu0 %v1272
  %1342 = vmatmul.mubr.bf16.gmra.mxu0 %v1251
  %v1343 = vpop.f32.mrf.mxu0
  %v1344 = vadd.f32 %v1182, %v1343
  %v1345 = vpop.f32.mrf.mxu0
  %v1346 = vadd.f32 %v1182, %v1345
  %v1347 = vpop.f32.mrf.mxu0
  %v1348 = vadd.f32 %v1187, %v1347
  %v1349 = vpop.f32.mrf.mxu0
  %v1350 = vadd.f32 %v1187, %v1349
  %1351 = vmatprep.mubr.bf16.mxu0 %v1275
  %1352 = vmatmul.mubr.bf16.gmra.mxu0 %v1253
  %v1353 = vpop.f32.mrf.mxu0
  %v1354 = vadd.f32 %v1192, %v1353
  %v1355 = vpop.f32.mrf.mxu0
  %v1356 = vadd.f32 %v1192, %v1355
  %v1357 = vpop.f32.mrf.mxu0
  %v1358 = vadd.f32 %v1197, %v1357
  %v1359 = vpop.f32.mrf.mxu0
  %v1360 = vadd.f32 %v1197, %v1359
  %1361 = vmatprep.mubr.bf16.mxu0 %v1278
  %1362 = vmatmul.mubr.bf16.gmra.mxu0 %v1255
  %v1363 = vpop.f32.mrf.mxu0
  %v1364 = vadd.f32 %v1202, %v1363
  %v1365 = vpop.f32.mrf.mxu0
  %v1366 = vadd.f32 %v1202, %v1365
  %v1367 = vpop.f32.mrf.mxu0
  %v1368 = vadd.f32 %v1207, %v1367
  %v1369 = vpop.f32.mrf.mxu0
  %v1370 = vadd.f32 %v1207, %v1369
  %1371 = vmatprep.mubr.bf16.mxu0 %v1281
  %1372 = vmatmul.mubr.bf16.gmra.mxu0 %v1257
  %v1373 = vpop.f32.mrf.mxu0
  %v1374 = vadd.f32 %v1212, %v1373
  %v1375 = vpop.f32.mrf.mxu0
  %v1376 = vadd.f32 %v1212, %v1375
  %v1377 = vpop.f32.mrf.mxu0
  %v1378 = vpop.f32.mrf.mxu0
  %1379 = vdwg.mxu0
  %v1380 = vmax.f32 %v1324, 0.0
  %v1381 = vmax.f32 %v1326, 0.0
  %v1382 = vmax.f32 %v1328, 0.0
  %v1383 = vmax.f32 %v1330, 0.0
  %v1384 = vmax.f32 %v1334, 0.0
  %v1385 = vmax.f32 %v1336, 0.0
  %v1386 = vmax.f32 %v1338, 0.0
  %v1387 = vmax.f32 %v1340, 0.0
  %v1388 = vmax.f32 %v1344, 0.0
  %v1389 = vmax.f32 %v1346, 0.0
  %v1390 = vmax.f32 %v1348, 0.0
  %v1391 = vmax.f32 %v1350, 0.0
  %v1392 = vmax.f32 %v1354, 0.0
  %v1393 = vmax.f32 %v1356, 0.0
  %v1394 = vmax.f32 %v1358, 0.0
  %v1395 = vmax.f32 %v1360, 0.0
  %v1396 = vmax.f32 %v1364, 0.0
  %v1397 = vmax.f32 %v1366, 0.0
  %v1398 = vmax.f32 %v1368, 0.0
  %v1399 = vmax.f32 %v1370, 0.0
  %v1400 = vmax.f32 %v1374, 0.0
  %v1401 = vmax.f32 %v1376, 0.0
  %v1402 = vld [vmem:[%s7] sm:$0xff]
  %v1403 = vld [vmem:[%s7 + $0x8] sm:$0xff]
  %v1404 = vld [vmem:[%s7 + $0x10] sm:$0xff]
  %v1405 = vld [vmem:[%s7 + $0x18] sm:$0xff]
  %v1406 = vld [vmem:[%s7 + $0x20] sm:$0xff]
  %v1407 = vld [vmem:[%s7 + $0x28] sm:$0xff]
  %v1408 = vld [vmem:[%s7 + $0x30] sm:$0xff]
  %v1409 = vld [vmem:[%s7 + $0x38] sm:$0xff]
  %v1410 = vld [vmem:[%s7 + $0x40] sm:$0xff]
  %v1411 = vld [vmem:[%s7 + $0x48] sm:$0xff]
  %v1412 = vld [vmem:[%s7 + $0x50] sm:$0x7]
  %1414 = vset.pattern.permute.xlu0 0
  %1415 = vperm.xlu0 %1414, %v1402
  %v1416 = vpop.permute.xlu0 %1415
  %1419 = vset.pattern.permute.xlu0 0
  %1420 = vperm.xlu0 %1419, %v1403
  %v1421 = vpop.permute.xlu0 %1420
  %1424 = vset.pattern.permute.xlu0 0
  %1425 = vperm.xlu0 %1424, %v1404
  %v1426 = vpop.permute.xlu0 %1425
  %1429 = vset.pattern.permute.xlu0 0
  %1430 = vperm.xlu0 %1429, %v1405
  %v1431 = vpop.permute.xlu0 %1430
  %1434 = vset.pattern.permute.xlu0 0
  %1435 = vperm.xlu0 %1434, %v1406
  %v1436 = vpop.permute.xlu0 %1435
  %1439 = vset.pattern.permute.xlu0 0
  %1440 = vperm.xlu0 %1439, %v1407
  %v1441 = vpop.permute.xlu0 %1440
  %1444 = vset.pattern.permute.xlu0 0
  %1445 = vperm.xlu0 %1444, %v1408
  %v1446 = vpop.permute.xlu0 %1445
  %1449 = vset.pattern.permute.xlu0 0
  %1450 = vperm.xlu0 %1449, %v1409
  %v1451 = vpop.permute.xlu0 %1450
  %1454 = vset.pattern.permute.xlu0 0
  %1455 = vperm.xlu0 %1454, %v1410
  %v1456 = vpop.permute.xlu0 %1455
  %1459 = vset.pattern.permute.xlu0 0
  %1460 = vperm.xlu0 %1459, %v1411
  %v1461 = vpop.permute.xlu0 %1460
  %1464 = vset.pattern.permute.xlu0 0
  %1465 = vperm.xlu0 %1464, %v1412
  %v1466 = vpop.permute.xlu0 %1465
  %v1468 = vmul.f32 %v1416, %v1380
  %v1469 = vmul.f32 %v1416, %v1381
  %v1470 = vmul.f32 %v1421, %v1382
  %v1471 = vmul.f32 %v1421, %v1383
  %v1472 = vmul.f32 %v1426, %v1384
  %v1473 = vmul.f32 %v1426, %v1385
  %v1474 = vmul.f32 %v1431, %v1386
  %v1475 = vmul.f32 %v1431, %v1387
  %v1476 = vmul.f32 %v1436, %v1388
  %v1477 = vmul.f32 %v1436, %v1389
  %v1478 = vmul.f32 %v1441, %v1390
  %v1479 = vmul.f32 %v1441, %v1391
  %v1480 = vmul.f32 %v1446, %v1392
  %v1481 = vmul.f32 %v1446, %v1393
  %v1482 = vmul.f32 %v1451, %v1394
  %v1483 = vmul.f32 %v1451, %v1395
  %v1484 = vmul.f32 %v1456, %v1396
  %v1485 = vmul.f32 %v1456, %v1397
  %v1486 = vmul.f32 %v1461, %v1398
  %v1487 = vmul.f32 %v1461, %v1399
  %v1488 = vmul.f32 %v1466, %v1400
  %v1489 = vmul.f32 %v1466, %v1401
  %v1490 = vadd.f32 %v1468, %v1470
  %v1491 = vadd.f32 %v1490, %v1472
  %v1492 = vadd.f32 %v1491, %v1474
  %v1493 = vadd.f32 %v1492, %v1476
  %v1494 = vadd.f32 %v1493, %v1478
  %v1495 = vadd.f32 %v1494, %v1480
  %v1496 = vadd.f32 %v1495, %v1482
  %v1497 = vadd.f32 %v1496, %v1484
  %v1498 = vadd.f32 %v1497, %v1486
  %v1499 = vsel %vm438, %v1488, 0.0
  %v1500 = vadd.f32 %v1498, %v1499
  %v1501 = vrot.slane %v1500, 4
  %v1502 = vadd.f32 %v1500, %v1501
  %v1503 = vrot.slane %v1502, 2
  %v1504 = vadd.f32 %v1502, %v1503
  %v1505 = vrot.slane %v1504, 1
  %v1506 = vadd.f32 %v1504, %v1505
  %v1507 = vadd.f32 %v1469, %v1471
  %v1508 = vadd.f32 %v1507, %v1473
  %v1509 = vadd.f32 %v1508, %v1475
  %v1510 = vadd.f32 %v1509, %v1477
  %v1511 = vadd.f32 %v1510, %v1479
  %v1512 = vadd.f32 %v1511, %v1481
  %v1513 = vadd.f32 %v1512, %v1483
  %v1514 = vadd.f32 %v1513, %v1485
  %v1515 = vadd.f32 %v1514, %v1487
  %v1516 = vsel %vm438, %v1489, 0.0
  %v1517 = vadd.f32 %v1515, %v1516
  %v1518 = vrot.slane %v1517, 4
  %v1519 = vadd.f32 %v1517, %v1518
  %v1520 = vrot.slane %v1519, 2
  %v1521 = vadd.f32 %v1519, %v1520
  %v1522 = vrot.slane %v1521, 1
  %v1523 = vadd.f32 %v1521, %v1522
  %v1524 = vld [vmem:[#allocation2] sm:$0x1]
  %1526 = vset.pattern.permute.xlu0 0
  %1527 = vperm.xlu0 %1526, %v1524
  %v1528 = vpop.permute.xlu0 %1527
  %v1530 = vlaneseq
  %v1531 = vshrl.u32 %v1530, 7
  %v1532 = vsub.s32 0, %v1531
  %v1533 = vrot.slane %v1528, %v1532
  %v1534 = vadd.f32 %v1506, %v1533
  %v1535 = vadd.f32 %v1523, %v1533
  %v1536 = vmax.f32 %v1534, 0.0
  %v1537 = vmax.f32 %v1535, 0.0
  %v1540 = vcombine.low %v1536, %v1537
  %v1542 = vunpack.c.l.s4 1966171168
  %v1543 = vunpack.c.0.s8 %v1542
  %v1544 = vlaneseq
  %v1545 = vshrl.u32 %v1544, 7
  %v1546 = vsub.s32 %v1543, %v1545
  %v1547 = vrot.slane %v1540, %v1546
  %v1549 = vunpack.c.l.s4 1966171168
  %v1550 = vunpack.c.0.s8 %v1549
  %v1551 = vlaneseq
  %v1552 = vshrl.u32 %v1551, 7
  %v1553 = vsub.s32 %v1550, %v1552
  %v1554 = vrot.slane %v1547, %v1553
  %v1556 = vlaneseq
  %vm1557 = vcmp.ge.s32.totalorder %v1556, 0
  %vm1558 = vcmp.lt.s32.totalorder %v1556, 256
  %vm1559 = vmand %vm1557, %vm1558
  %1560 = vst.msk [vmem:[%s9] sm:$0x3] %vm1559, %v1554
  // Predicated region
  $region38: #{dnn_forward.1} parent=0 // pred_check
    _
  $region39: #{dnn_forward.1} parent=0 // pred_check_branch
    %1562 = sbr.rel (0) target = $region41
  $region40: #{dnn_forward.1} parent=0 // pred_region
    _
  $region41: #{dnn_forward.1} parent=0 // pred_fallthru
    _
  // Predicated region
  $region42: #{dnn_forward.1} parent=0 // pred_check
    _
  $region43: #{dnn_forward.1} parent=0 // pred_check_branch
    %1564 = sbr.rel (0) target = $region45
  $region44: #{dnn_forward.1} parent=0 // pred_region
    _
  $region45: #{dnn_forward.1} parent=0 // pred_fallthru
    _

</llo_original>
